<compile_context>
chip_gen: v7x
topology: tpu7x:2x2x1
jax: 0.10.0
libtpu: 0.0.40
codegen_flags: <defaults>
</compile_context>

<pallas_src>
import functools

import jax
import jax.numpy as jnp
from jax.experimental import pallas as pl
from jax.experimental.pallas import tpu as pltpu

_MIB = 1024 * 1024


def _round_up(x, m):
    return ((x + m - 1) // m) * m


def _cdiv(a, b):
    return (a + b - 1) // b


def _swiglu_mlp_kernel(x_ref, w1_ref, w3_ref, w2_ref, o_ref, acc_ref):
    """One (token-tile, ffn-tile) step of (silu(x@W1) * (x@W3)) @ W2."""
    f = pl.program_id(1)

    @pl.when(f == 0)
    def _():
        acc_ref[...] = jnp.zeros_like(acc_ref)

    x = x_ref[...]
    # Gate and up projections as two separate MXU dots (each N >= MXU width, so
    # this is MXU-equivalent to one fused wide dot, without lane-slice copies).
    h1 = jnp.dot(x, w1_ref[...], preferred_element_type=jnp.float32)
    h3 = jnp.dot(x, w3_ref[...], preferred_element_type=jnp.float32)
    # Numerically-stable silu: sigmoid(x) = {1, e}/(1 + e) with e = exp(-|x|),
    # so exp never overflows for large-magnitude negative activations.
    e = jnp.exp(-jnp.abs(h1))
    sig = jnp.where(h1 >= 0.0, 1.0, e) / (1.0 + e)
    gated = h1 * sig * h3
    # Partial down-projection for this ffn tile, accumulated in f32.
    acc_ref[...] += jnp.dot(gated.astype(w2_ref.dtype), w2_ref[...],
                            preferred_element_type=jnp.float32)

    @pl.when(f == pl.num_programs(1) - 1)
    def _():
        o_ref[...] = acc_ref[...].astype(o_ref.dtype)


def _chip_info():
    """Best-effort (generation, VMEM capacity bytes) for the default device."""
    try:
        kind = jax.devices()[0].device_kind.lower()
    except Exception:
        kind = ""
    if "v5 lite" in kind or "v5e" in kind or "v5lite" in kind:
        gen = "v5e"
    elif "v6" in kind:
        gen = "v6e"
    elif "v7" in kind or "tpu7" in kind:
        gen = "v7x"
    elif "v5" in kind:   # v5p
        gen = "v5p"
    else:
        gen = "unknown"
    default_vmem_mib = {"v5e": 128, "v5p": 128, "v6e": 128, "v7x": 64}.get(gen, 64)
    try:
        vmem_cap = int(pltpu.get_tpu_info().vmem_capacity_bytes)
    except Exception:
        vmem_cap = default_vmem_mib * _MIB
    return gen, vmem_cap


def _pick_ffn_tile(ffn, target):
    """Largest multiple-of-128 divisor of ffn that is <= target (else ffn)."""
    if ffn <= target:
        return ffn
    best = 0
    t = 128
    while t <= target:
        if ffn % t == 0:
            best = t
        t += 128
    return best if best > 0 else ffn


def _select_tiles(tokens, h, ffn, dtype, gen, vmem_cap):
    isz = jnp.dtype(dtype).itemsize
    sub = max(8, 32 // isz)          # sublane multiple: 8 f32, 16 bf16, 32 int8
    target_tm = {"v5e": 256, "v5p": 512, "v6e": 768, "v7x": 384}.get(gen, 256)
    target_tf = {"v5e": 1024, "v5p": 1024, "v6e": 1024, "v7x": 512}.get(gen, 512)

    # Adaptive token tile: never pad decode-shaped inputs out to a huge tile.
    tokens_r = _round_up(max(tokens, 1), sub)
    tm = min(_round_up(target_tm, sub), tokens_r)

    # v7x has 2 TensorCores sharded over the "parallel" token axis: make sure
    # short sequences still produce >= 2 token tiles.
    if gen == "v7x" and tokens_r > sub and _cdiv(tokens_r, tm) < 2:
        tm = max(sub, _round_up(_cdiv(tokens_r, 2), sub))

    tf = _pick_ffn_tile(ffn, target_tf)

    budget = max(vmem_cap - 12 * _MIB, 24 * _MIB)

    def est(tm_, tf_):
        # double-buffered x / w1 / w3 / w2 / out tiles
        dbl = 2 * (tm_ * h + 2 * h * tf_ + tf_ * h + tm_ * h) * isz
        acc = tm_ * h * 4                 # resident f32 accumulator
        inter = 3 * tm_ * tf_ * 4         # live f32 h1 / h3 / gated
        return dbl + acc + inter

    while est(tm, tf) > budget:
        half_tf = tf // 2
        if tf > 512 and half_tf >= 128 and half_tf % 128 == 0 and ffn % half_tf == 0:
            tf = half_tf
        elif tm > sub:
            tm = max(sub, _round_up(tm // 2, sub))
        else:
            break

    vmem_limit = int(min(vmem_cap - 4 * _MIB,
                         max(est(tm, tf) + 16 * _MIB, 32 * _MIB)))
    return int(tm), int(tf), vmem_limit


@functools.partial(jax.jit, static_argnames=("tm", "tf", "vmem_limit"))
def _swiglu_mlp(hidden_states, w1, w3, w2, *, tm, tf, vmem_limit):
    s, b, h = hidden_states.shape
    ffn = w1.shape[1]
    dtype = hidden_states.dtype
    tokens = s * b

    x = hidden_states.reshape(tokens, h)
    tokens_p = _round_up(tokens, tm)
    if tokens_p != tokens:
        # Zero rows: silu(0) * 0 = 0; sliced off below.
        x = jnp.pad(x, ((0, tokens_p - tokens), (0, 0)))

    grid = (tokens_p // tm, ffn // tf)

    out = pl.pallas_call(
        _swiglu_mlp_kernel,
        out_shape=jax.ShapeDtypeStruct((tokens_p, h), dtype),
        grid_spec=pltpu.PrefetchScalarGridSpec(
            num_scalar_prefetch=0,
            grid=grid,
            in_specs=[
                pl.BlockSpec((tm, h), lambda i, f: (i, 0)),   # activations
                pl.BlockSpec((h, tf), lambda i, f: (0, f)),   # W1 tile (gate)
                pl.BlockSpec((h, tf), lambda i, f: (0, f)),   # W3 tile (up)
                pl.BlockSpec((tf, h), lambda i, f: (f, 0)),   # W2 tile (down)
            ],
            out_specs=pl.BlockSpec((tm, h), lambda i, f: (i, 0)),
            scratch_shapes=[pltpu.VMEM((tm, h), jnp.float32)],
        ),
        compiler_params=pltpu.CompilerParams(
            dimension_semantics=("parallel", "arbitrary"),
            vmem_limit_bytes=int(vmem_limit),
        ),
    )(x, w1, w3, w2)

    return out[:tokens].reshape(s, b, h)


def mixtral_parallel_mlp(hidden_states, w1, w3, w2):
    """hidden_states: [seq, batch, hidden]; w1/w3: [hidden, ffn]; w2: [ffn, hidden]."""
    s, b, h = hidden_states.shape
    ffn = w1.shape[1]
    gen, vmem_cap = _chip_info()
    tm, tf, vmem_limit = _select_tiles(s * b, h, ffn, hidden_states.dtype,
                                       gen, vmem_cap)
    assert ffn % tf == 0
    return _swiglu_mlp(hidden_states, w1, w3, w2,
                       tm=tm, tf=tf, vmem_limit=vmem_limit)


def _reference(hidden_states, w1, w3, w2):
    x = hidden_states.astype(jnp.float32)
    h1 = x @ w1.astype(jnp.float32)
    h3 = x @ w3.astype(jnp.float32)
    g = jax.nn.silu(h1) * h3
    return (g @ w2.astype(jnp.float32)).astype(hidden_states.dtype)


if __name__ == "__main__":
    seq, batch = 16, 8
    hidden_size = 64
    ffn_hidden_size = 128
    dtype = jnp.float32

    key = jax.random.PRNGKey(0)
    kx, k1, k3, k2 = jax.random.split(key, 4)

    hidden_states = jax.random.normal(kx, (seq, batch, hidden_size), dtype=dtype)
    # Deterministic "init_method"-style small random weights (no biases).
    w1 = (jax.random.normal(k1, (hidden_size, ffn_hidden_size), dtype=dtype)
          * hidden_size ** -0.5)
    w3 = (jax.random.normal(k3, (hidden_size, ffn_hidden_size), dtype=dtype)
          * hidden_size ** -0.5)
    w2 = (jax.random.normal(k2, (ffn_hidden_size, hidden_size), dtype=dtype)
          * ffn_hidden_size ** -0.5)

    out = jax.block_until_ready(mixtral_parallel_mlp(hidden_states, w1, w3, w2))
    ref = _reference(hidden_states, w1, w3, w2)
    assert out.shape == hidden_states.shape
    assert jnp.allclose(out, ref, atol=2e-3, rtol=2e-3), "mismatch vs reference"

    # Ragged token count (5*3 = 15 tokens) exercises the padding path.
    hs2 = jax.random.normal(kx, (5, 3, hidden_size), dtype=dtype)
    out2 = jax.block_until_ready(mixtral_parallel_mlp(hs2, w1, w3, w2))
    ref2 = _reference(hs2, w1, w3, w2)
    assert out2.shape == hs2.shape
    assert jnp.allclose(out2, ref2, atol=2e-3, rtol=2e-3), "mismatch (ragged)"

    # TODO(synk): activation-recompute (CheckpointWithoutOutput backward hook)
    # and Column/RowParallelLinear tensor-parallel communication are training /
    # multi-device plumbing with no single-kernel Pallas equivalent; forward
    # math is identical.
    print("KERNEL_OK")
</pallas_src>

<mosaic_0001>
module attributes {stable_mosaic.version = 11 : i64} {
  func.func @_swiglu_mlp_kernel(%arg0: i32, %arg1: i32, %arg2: memref<128x64xf32, #tpu.memory_space<vmem>>, %arg3: memref<64x128xf32, #tpu.memory_space<vmem>>, %arg4: memref<64x128xf32, #tpu.memory_space<vmem>>, %arg5: memref<128x64xf32, #tpu.memory_space<vmem>>, %arg6: memref<128x64xf32, #tpu.memory_space<vmem>>, %arg7: memref<128x64xf32, #tpu.memory_space<vmem>>) attributes {dimension_semantics = [#tpu.dimension_semantics<parallel>, #tpu.dimension_semantics<arbitrary>], iteration_bounds = array<i64: 1, 1>, scalar_prefetch = 0 : i64, scratch_operands = 1 : i64, tpu.core_type = #tpu.core_type<tc>, window_params = [{transform_indices = @transform_0, window_bounds = array<i64: 128, 64>}, {transform_indices = @transform_1, window_bounds = array<i64: 64, 128>}, {transform_indices = @transform_2, window_bounds = array<i64: 64, 128>}, {transform_indices = @transform_3, window_bounds = array<i64: 128, 64>}, {transform_indices = @transform_4, window_bounds = array<i64: 128, 64>}]} {
    %c0_i32 = arith.constant 0 : i32
    %0 = arith.cmpi eq, %arg1, %c0_i32 : i32
    %1 = arith.extui %0 : i1 to i32
    %c0_i32_0 = arith.constant 0 : i32
    %2 = arith.cmpi ne, %1, %c0_i32_0 : i32
    scf.if %2 {
      %cst_20 = arith.constant 0.000000e+00 : f32
      %29 = vector.broadcast %cst_20 : f32 to vector<128x64xf32>
      %c0_21 = arith.constant 0 : index
      %c0_22 = arith.constant 0 : index
      %30 = vector.load %arg7[%c0_21, %c0_22] : memref<128x64xf32, #tpu.memory_space<vmem>>, vector<128x64xf32>
      tpu.vector_store %arg7[%c0_21, %c0_22], %29 {strides = array<i32>} : memref<128x64xf32, #tpu.memory_space<vmem>>, vector<128x64xf32>,
    } else {
    }
    %c0 = arith.constant 0 : index
    %c0_1 = arith.constant 0 : index
    %3 = vector.load %arg2[%c0, %c0_1] : memref<128x64xf32, #tpu.memory_space<vmem>>, vector<128x64xf32>
    %c0_2 = arith.constant 0 : index
    %c0_3 = arith.constant 0 : index
    %4 = vector.load %arg3[%c0_2, %c0_3] : memref<64x128xf32, #tpu.memory_space<vmem>>, vector<64x128xf32>
    %cst = arith.constant dense<0.000000e+00> : vector<128x128xf32>
    %5 = tpu.matmul %3, %4, %cst {dimension_numbers = #tpu.dot_dimension_numbers<[1], [0], [0], [1], [0, 0, 1, 1], [], []>} : vector<128x64xf32>, vector<64x128xf32>, vector<128x128xf32> -> vector<128x128xf32>
    %c0_4 = arith.constant 0 : index
    %c0_5 = arith.constant 0 : index
    %6 = vector.load %arg4[%c0_4, %c0_5] : memref<64x128xf32, #tpu.memory_space<vmem>>, vector<64x128xf32>
    %cst_6 = arith.constant dense<0.000000e+00> : vector<128x128xf32>
    %7 = tpu.matmul %3, %6, %cst_6 {dimension_numbers = #tpu.dot_dimension_numbers<[1], [0], [0], [1], [0, 0, 1, 1], [], []>} : vector<128x64xf32>, vector<64x128xf32>, vector<128x128xf32> -> vector<128x128xf32>
    %8 = math.absf %5 : vector<128x128xf32>
    %cst_7 = arith.constant 0.000000e+00 : f32
    %9 = vector.broadcast %cst_7 : f32 to vector<128x128xf32>
    %10 = arith.subf %9, %8 : vector<128x128xf32>
    %11 = math.exp %10 : vector<128x128xf32>
    %cst_8 = arith.constant 0.000000e+00 : f32
    %12 = vector.broadcast %cst_8 : f32 to vector<128x128xf32>
    %13 = arith.cmpf oge, %5, %12 : vector<128x128xf32>
    %cst_9 = arith.constant 1.000000e+00 : f32
    %14 = vector.broadcast %cst_9 : f32 to vector<128x128xf32>
    %15 = arith.select %13, %14, %11 : vector<128x128xi1>, vector<128x128xf32>
    %cst_10 = arith.constant 1.000000e+00 : f32
    %16 = vector.broadcast %cst_10 : f32 to vector<128x128xf32>
    %17 = arith.addf %16, %11 : vector<128x128xf32>
    %18 = arith.divf %15, %17 : vector<128x128xf32>
    %19 = arith.mulf %5, %18 : vector<128x128xf32>
    %20 = arith.mulf %19, %7 : vector<128x128xf32>
    %c0_11 = arith.constant 0 : index
    %c0_12 = arith.constant 0 : index
    %21 = vector.load %arg7[%c0_11, %c0_12] : memref<128x64xf32, #tpu.memory_space<vmem>>, vector<128x64xf32>
    %c0_13 = arith.constant 0 : index
    %c0_14 = arith.constant 0 : index
    %22 = vector.load %arg5[%c0_13, %c0_14] : memref<128x64xf32, #tpu.memory_space<vmem>>, vector<128x64xf32>
    %cst_15 = arith.constant dense<0.000000e+00> : vector<128x64xf32>
    %23 = tpu.matmul %20, %22, %cst_15 {dimension_numbers = #tpu.dot_dimension_numbers<[1], [0], [0], [1], [0, 0, 1, 1], [], []>} : vector<128x128xf32>, vector<128x64xf32>, vector<128x64xf32> -> vector<128x64xf32>
    %24 = arith.addf %21, %23 : vector<128x64xf32>
    %c0_16 = arith.constant 0 : index
    %c0_17 = arith.constant 0 : index
    %25 = vector.load %arg7[%c0_16, %c0_17] : memref<128x64xf32, #tpu.memory_space<vmem>>, vector<128x64xf32>
    tpu.vector_store %arg7[%c0_16, %c0_17], %24 {strides = array<i32>} : memref<128x64xf32, #tpu.memory_space<vmem>>, vector<128x64xf32>,
    %c0_i32_18 = arith.constant 0 : i32
    %26 = arith.cmpi eq, %arg1, %c0_i32_18 : i32
    %27 = arith.extui %26 : i1 to i32
    %c0_i32_19 = arith.constant 0 : i32
    %28 = arith.cmpi ne, %27, %c0_i32_19 : i32
    scf.if %28 {
      %c0_20 = arith.constant 0 : index
      %c0_21 = arith.constant 0 : index
      %29 = vector.load %arg7[%c0_20, %c0_21] : memref<128x64xf32, #tpu.memory_space<vmem>>, vector<128x64xf32>
      %c0_22 = arith.constant 0 : index
      %c0_23 = arith.constant 0 : index
      %30 = vector.load %arg6[%c0_22, %c0_23] : memref<128x64xf32, #tpu.memory_space<vmem>>, vector<128x64xf32>
      tpu.vector_store %arg6[%c0_22, %c0_23], %29 {strides = array<i32>} : memref<128x64xf32, #tpu.memory_space<vmem>>, vector<128x64xf32>,
    } else {
    }
    return
  }
  func.func @transform_0(%arg0: i32, %arg1: i32) -> (i32, i32) {
    %c0_i32 = arith.constant 0 : i32
    %c0_i32_0 = arith.constant 0 : i32
    return %arg0, %c0_i32 : i32, i32
  }
  func.func @transform_1(%arg0: i32, %arg1: i32) -> (i32, i32) {
    %c0_i32 = arith.constant 0 : i32
    %c0_i32_0 = arith.constant 0 : i32
    return %c0_i32, %arg1 : i32, i32
  }
  func.func @transform_2(%arg0: i32, %arg1: i32) -> (i32, i32) {
    %c0_i32 = arith.constant 0 : i32
    %c0_i32_0 = arith.constant 0 : i32
    return %c0_i32, %arg1 : i32, i32
  }
  func.func @transform_3(%arg0: i32, %arg1: i32) -> (i32, i32) {
    %c0_i32 = arith.constant 0 : i32
    %c0_i32_0 = arith.constant 0 : i32
    return %arg1, %c0_i32 : i32, i32
  }
  func.func @transform_4(%arg0: i32, %arg1: i32) -> (i32, i32) {
    %c0_i32 = arith.constant 0 : i32
    %c0_i32_0 = arith.constant 0 : i32
    return %arg0, %c0_i32 : i32, i32
  }
}

</mosaic_0001>

<llo_original>
// kernel: _swiglu_mlp.1
$region0: #{_swiglu_mlp.1}
  #allocation0 [shape = 'u32[]', space=smem, size = 0x4, offset = 0x4, fixed_abs, tag = 'smem constant byte address 0x4 - core index']
  #allocation1 [shape = 'u32[144,128]{1,0:T(1,128)}', space=vmem, size = 0x12000, scoped, tag = 'internal scratch']
  #allocation2 [shape = 'f32[128,64]{1,0:T(8,128)}', space=vmem, size = 0x10000, scoped, tag = 'scratch operand']
  %s0 = inlined_call_operand.vmem [shape: f32[128,64], index: 0, kind: input, shape index: {}]
  %s1 = inlined_call_operand.vmem [shape: f32[64,128], index: 1, kind: input, shape index: {}]
  %s2 = inlined_call_operand.hbm [shape: f32[64,128], index: 2, kind: input, shape index: {}]
  %s3 = inlined_call_operand.vmem [shape: f32[128,64], index: 3, kind: input, shape index: {}]
  %s4 = inlined_call_operand.hbm [shape: f32[128,64], index: 4, kind: output, shape index: {}]
  %s5 = sld [smem:[#allocation0]]
  $region38: #{_swiglu_mlp.1} parent=0
    _
  %s7 = ssub.s32 1, %s5
  %s8 = scalar_select 0, %s7, %s5
  $region1: #{_swiglu_mlp.1} parent=0
    #allocation3 [shape = 'u8[32768]{0}', space=vmem, size = 0x8000, scoped, tag = 'input window, operand 2, single buffered']
    #allocation4 [shape = 's32[1]{0}', space=sflag, size = 0x4, scoped, tag = 'scoped memory for _swiglu_mlp.1']
    #allocation5 [shape = 's32[1]{0}', space=sflag, size = 0x4, scoped, tag = 'scoped memory for _swiglu_mlp.1']
    #allocation6 [shape = 'u8[65536]{0}', space=vmem, size = 0x10000, scoped, tag = 'output window, operand 0, single buffered']
    %9 = vsyncpa [#allocation4], 0
    %10 = vsyncpa [#allocation5], 0
    // Predicated region
    $region2: #{_swiglu_mlp.1} parent=1 // pred_check
      _
    $region3: #{_swiglu_mlp.1} parent=1 // pred_check_branch
      %12 = sbr.rel (0) target = $region5
    $region4: #{_swiglu_mlp.1} parent=1 // pred_region
      _
    $region5: #{_swiglu_mlp.1} parent=1 // pred_fallthru
      _
    // Predicated region
    $region6: #{_swiglu_mlp.1} parent=1 // pred_check
      _
    $region7: #{_swiglu_mlp.1} parent=1 // pred_check_branch
      %14 = sbr.rel (0) target = $region9
    $region8: #{_swiglu_mlp.1} parent=1 // pred_region
      _
    $region9: #{_swiglu_mlp.1} parent=1 // pred_fallthru
      _
    // Predicated region
    $region10: #{_swiglu_mlp.1} parent=1 // pred_check
      _
    $region11: #{_swiglu_mlp.1} parent=1 // pred_check_branch
      %16 = sbr.rel (0) target = $region13
    $region12: #{_swiglu_mlp.1} parent=1 // pred_region
      %s18 = ssub.s32 1024, 1024
      %19 = vsyncadd [#allocation4], %s18
      %s20 = sshll.u32 [#allocation3], 4
      %s21 = int_to_ptr.vmem [resolvable:$true] %s20
      %26 = dma.hbm_to_vmem [thread:$0]  %s2, 1024, %s21, [#allocation4], 128, 128, 8
    $region13: #{_swiglu_mlp.1} parent=1 // pred_fallthru
      _
    // Predicated region
    $region14: #{_swiglu_mlp.1} parent=1 // pred_check
      _
    $region15: #{_swiglu_mlp.1} parent=1 // pred_check_branch
      %28 = sbr.rel (0) target = $region17
    $region16: #{_swiglu_mlp.1} parent=1 // pred_region
      _
    $region17: #{_swiglu_mlp.1} parent=1 // pred_fallthru
      _
    // Predicated region
    $region18: #{_swiglu_mlp.1} parent=1 // pred_check
      _
    $region19: #{_swiglu_mlp.1} parent=1 // pred_check_branch
      %30 = sbr.rel (0) target = $region21
    $region20: #{_swiglu_mlp.1} parent=1 // pred_region
      %31 = dma.done [#allocation4], 1024
    $region21: #{_swiglu_mlp.1} parent=1 // pred_fallthru
      _
    %p32 = scmp.eq.s32.totalorder 0, 0
    // Predicated region
    $region22: #{_swiglu_mlp.1} parent=1 // pred_check
      %p33 = pneg %p32
    $region23: #{_swiglu_mlp.1} parent=1 // pred_check_branch
      %35 = sbr.rel (%p33) target = $region25
    $region24: #{_swiglu_mlp.1} parent=1 // pred_region
      %vm36 = vcmask 523264
      %37 = vst.msk [vmem:[#allocation2] sm:$0xff] %vm36, 0.0
      %38 = vst.msk [vmem:[#allocation2 + $0x8] sm:$0xff] %vm36, 0.0
      %39 = vst.msk [vmem:[#allocation2 + $0x10] sm:$0xff] %vm36, 0.0
      %40 = vst.msk [vmem:[#allocation2 + $0x18] sm:$0xff] %vm36, 0.0
      %41 = vst.msk [vmem:[#allocation2 + $0x20] sm:$0xff] %vm36, 0.0
      %42 = vst.msk [vmem:[#allocation2 + $0x28] sm:$0xff] %vm36, 0.0
      %43 = vst.msk [vmem:[#allocation2 + $0x30] sm:$0xff] %vm36, 0.0
      %44 = vst.msk [vmem:[#allocation2 + $0x38] sm:$0xff] %vm36, 0.0
      %45 = vst.msk [vmem:[#allocation2 + $0x40] sm:$0xff] %vm36, 0.0
      %46 = vst.msk [vmem:[#allocation2 + $0x48] sm:$0xff] %vm36, 0.0
      %47 = vst.msk [vmem:[#allocation2 + $0x50] sm:$0xff] %vm36, 0.0
      %48 = vst.msk [vmem:[#allocation2 + $0x58] sm:$0xff] %vm36, 0.0
      %49 = vst.msk [vmem:[#allocation2 + $0x60] sm:$0xff] %vm36, 0.0
      %50 = vst.msk [vmem:[#allocation2 + $0x68] sm:$0xff] %vm36, 0.0
      %51 = vst.msk [vmem:[#allocation2 + $0x70] sm:$0xff] %vm36, 0.0
      %52 = vst.msk [vmem:[#allocation2 + $0x78] sm:$0xff] %vm36, 0.0
    $region25: #{_swiglu_mlp.1} parent=1 // pred_fallthru
      _
    %v53 = vld [vmem:[%s0] sm:$0xff]
    %v54 = vld [vmem:[%s0 + $0x8] sm:$0xff]
    %v55 = vld [vmem:[%s0 + $0x10] sm:$0xff]
    %v56 = vld [vmem:[%s0 + $0x18] sm:$0xff]
    %v57 = vld [vmem:[%s0 + $0x20] sm:$0xff]
    %v58 = vld [vmem:[%s0 + $0x28] sm:$0xff]
    %v59 = vld [vmem:[%s0 + $0x30] sm:$0xff]
    %v60 = vld [vmem:[%s0 + $0x38] sm:$0xff]
    %v61 = vld [vmem:[%s0 + $0x40] sm:$0xff]
    %v62 = vld [vmem:[%s0 + $0x48] sm:$0xff]
    %v63 = vld [vmem:[%s0 + $0x50] sm:$0xff]
    %v64 = vld [vmem:[%s0 + $0x58] sm:$0xff]
    %v65 = vld [vmem:[%s0 + $0x60] sm:$0xff]
    %v66 = vld [vmem:[%s0 + $0x68] sm:$0xff]
    %v67 = vld [vmem:[%s0 + $0x70] sm:$0xff]
    %v68 = vld [vmem:[%s0 + $0x78] sm:$0xff]
    %v69 = vld [vmem:[%s1] sm:$0xff]
    %v70 = vld [vmem:[%s1 + $0x8] sm:$0xff]
    %v71 = vld [vmem:[%s1 + $0x10] sm:$0xff]
    %v72 = vld [vmem:[%s1 + $0x18] sm:$0xff]
    %v73 = vld [vmem:[%s1 + $0x20] sm:$0xff]
    %v74 = vld [vmem:[%s1 + $0x28] sm:$0xff]
    %v75 = vld [vmem:[%s1 + $0x30] sm:$0xff]
    %v76 = vld [vmem:[%s1 + $0x38] sm:$0xff]
    %vm77 = vcmask 523264
    %v79 = vsel %vm77, %v53, 0
    %v82 = vsel %vm77, %v54, 0
    %v85 = vsel %vm77, %v55, 0
    %v88 = vsel %vm77, %v56, 0
    %v91 = vsel %vm77, %v57, 0
    %v94 = vsel %vm77, %v58, 0
    %v97 = vsel %vm77, %v59, 0
    %v100 = vsel %vm77, %v60, 0
    %v103 = vsel %vm77, %v61, 0
    %v106 = vsel %vm77, %v62, 0
    %v109 = vsel %vm77, %v63, 0
    %v112 = vsel %vm77, %v64, 0
    %v115 = vsel %vm77, %v65, 0
    %v118 = vsel %vm77, %v66, 0
    %v121 = vsel %vm77, %v67, 0
    %v124 = vsel %vm77, %v68, 0
    %126 = vmatprep.subr.mxu0 0.0
    %127 = vmatpush1.msra.mxu0 %v69
    %128 = vmatprep.subr.mxu0 0.0
    %129 = vmatpush1.msra.mxu0 %v70
    %130 = vmatprep.subr.mxu0 0.0
    %131 = vmatpush1.msra.mxu0 %v71
    %132 = vmatprep.subr.mxu0 0.0
    %133 = vmatpush1.msra.mxu0 %v72
    %134 = vmatprep.subr.mxu0 0.0
    %135 = vmatpush1.msra.mxu0 %v73
    %136 = vmatprep.subr.mxu0 0.0
    %137 = vmatpush1.msra.mxu0 %v74
    %138 = vmatprep.subr.mxu0 0.0
    %139 = vmatpush1.msra.mxu0 %v75
    %140 = vmatprep.subr.mxu0 0.0
    %141 = vmatpush1.msra.mxu0 %v76
    %142 = vmatprep.subr.mxu0 0.0
    %143 = vmatpush1.msra.mxu0 0.0
    %144 = vmatprep.subr.mxu0 0.0
    %145 = vmatpush1.msra.mxu0 0.0
    %146 = vmatprep.subr.mxu0 0.0
    %147 = vmatpush1.msra.mxu0 0.0
    %148 = vmatprep.subr.mxu0 0.0
    %149 = vmatpush1.msra.mxu0 0.0
    %150 = vmatprep.subr.mxu0 0.0
    %151 = vmatpush1.msra.mxu0 0.0
    %152 = vmatprep.subr.mxu0 0.0
    %153 = vmatpush1.msra.mxu0 0.0
    %154 = vmatprep.subr.mxu0 0.0
    %155 = vmatpush1.msra.mxu0 0.0
    %156 = vmatprep.subr.mxu0 0.0
    %157 = vmatpush1.msra.mxu0 0.0
    %158 = vmatprep.subr.mxu0 0.0
    %159 = vmatpush1.msra.mxu0 0.0
    %160 = vmatprep.subr.mxu0 0.0
    %161 = vmatpush1.msra.mxu0 0.0
    %162 = vmatprep.subr.mxu0 0.0
    %163 = vmatpush1.msra.mxu0 0.0
    %164 = vmatprep.subr.mxu0 0.0
    %165 = vmatpush1.msra.mxu0 0.0
    %166 = vmatprep.subr.mxu0 0.0
    %167 = vmatpush1.msra.mxu0 0.0
    %168 = vmatprep.subr.mxu0 0.0
    %169 = vmatpush1.msra.mxu0 0.0
    %170 = vmatprep.subr.mxu0 0.0
    %171 = vmatpush1.msra.mxu0 0.0
    %172 = vmatprep.subr.mxu0 0.0
    %173 = vmatpush1.msra.mxu0 0.0
    %174 = vmatprep.subr.mxu0 0.0
    %175 = vmatpush1.msra.mxu0 0.0
    %176 = vmatprep.subr.mxu0 0.0
    %177 = vmatpush1.msra.mxu0 0.0
    %178 = vmatprep.subr.mxu0 0.0
    %179 = vmatpush1.msra.mxu0 0.0
    %180 = vmatprep.subr.mxu0 0.0
    %181 = vmatpush1.msra.mxu0 0.0
    %182 = vmatprep.subr.mxu0 0.0
    %183 = vmatpush1.msra.mxu0 0.0
    %184 = vmatprep.subr.mxu0 0.0
    %185 = vmatpush1.msra.mxu0 0.0
    %186 = vmatprep.subr.mxu0 0.0
    %187 = vmatpush1.msra.mxu0 0.0
    %188 = vmatprep.subr.mxu0 0.0
    %189 = vmatpush1.msra.mxu0 0.0
    %190 = vmatprep.mubr.f32.mxu0 0.0
    %191 = vmatmul.mubr.f32.gmra.mrb[0].mxu0 %v79
    %v192 = vpop.f32.mrb[0].mxu0
    %v193 = vadd.f32 0.0, %v192
    %v194 = vpop.f32.mrb[0].mxu0
    %195 = vmatprep.mubr.f32.mxu0 0.0
    %196 = vmatmul.mubr.f32.gmra.mrb[0].mxu0 %v82
    %v197 = vpop.f32.mrb[0].mxu0
    %v198 = vadd.f32 0.0, %v197
    %v199 = vpop.f32.mrb[0].mxu0
    %200 = vmatprep.mubr.f32.mxu0 0.0
    %201 = vmatmul.mubr.f32.gmra.mrb[0].mxu0 %v85
    %v202 = vpop.f32.mrb[0].mxu0
    %v203 = vadd.f32 0.0, %v202
    %v204 = vpop.f32.mrb[0].mxu0
    %205 = vmatprep.mubr.f32.mxu0 0.0
    %206 = vmatmul.mubr.f32.gmra.mrb[0].mxu0 %v88
    %v207 = vpop.f32.mrb[0].mxu0
    %v208 = vadd.f32 0.0, %v207
    %v209 = vpop.f32.mrb[0].mxu0
    %210 = vmatprep.mubr.f32.mxu0 0.0
    %211 = vmatmul.mubr.f32.gmra.mrb[0].mxu0 %v91
    %v212 = vpop.f32.mrb[0].mxu0
    %v213 = vadd.f32 0.0, %v212
    %v214 = vpop.f32.mrb[0].mxu0
    %215 = vmatprep.mubr.f32.mxu0 0.0
    %216 = vmatmul.mubr.f32.gmra.mrb[0].mxu0 %v94
    %v217 = vpop.f32.mrb[0].mxu0
    %v218 = vadd.f32 0.0, %v217
    %v219 = vpop.f32.mrb[0].mxu0
    %220 = vmatprep.mubr.f32.mxu0 0.0
    %221 = vmatmul.mubr.f32.gmra.mrb[0].mxu0 %v97
    %v222 = vpop.f32.mrb[0].mxu0
    %v223 = vadd.f32 0.0, %v222
    %v224 = vpop.f32.mrb[0].mxu0
    %225 = vmatprep.mubr.f32.mxu0 0.0
    %226 = vmatmul.mubr.f32.gmra.mrb[0].mxu0 %v100
    %v227 = vpop.f32.mrb[0].mxu0
    %v228 = vadd.f32 0.0, %v227
    %v229 = vpop.f32.mrb[0].mxu0
    %230 = vmatprep.mubr.f32.mxu0 0.0
    %231 = vmatmul.mubr.f32.gmra.mrb[0].mxu0 %v103
    %v232 = vpop.f32.mrb[0].mxu0
    %v233 = vadd.f32 0.0, %v232
    %v234 = vpop.f32.mrb[0].mxu0
    %235 = vmatprep.mubr.f32.mxu0 0.0
    %236 = vmatmul.mubr.f32.gmra.mrb[0].mxu0 %v106
    %v237 = vpop.f32.mrb[0].mxu0
    %v238 = vadd.f32 0.0, %v237
    %v239 = vpop.f32.mrb[0].mxu0
    %240 = vmatprep.mubr.f32.mxu0 0.0
    %241 = vmatmul.mubr.f32.gmra.mrb[0].mxu0 %v109
    %v242 = vpop.f32.mrb[0].mxu0
    %v243 = vadd.f32 0.0, %v242
    %v244 = vpop.f32.mrb[0].mxu0
    %245 = vmatprep.mubr.f32.mxu0 0.0
    %246 = vmatmul.mubr.f32.gmra.mrb[0].mxu0 %v112
    %v247 = vpop.f32.mrb[0].mxu0
    %v248 = vadd.f32 0.0, %v247
    %v249 = vpop.f32.mrb[0].mxu0
    %250 = vmatprep.mubr.f32.mxu0 0.0
    %251 = vmatmul.mubr.f32.gmra.mrb[0].mxu0 %v115
    %v252 = vpop.f32.mrb[0].mxu0
    %v253 = vadd.f32 0.0, %v252
    %v254 = vpop.f32.mrb[0].mxu0
    %255 = vmatprep.mubr.f32.mxu0 0.0
    %256 = vmatmul.mubr.f32.gmra.mrb[0].mxu0 %v118
    %v257 = vpop.f32.mrb[0].mxu0
    %v258 = vadd.f32 0.0, %v257
    %v259 = vpop.f32.mrb[0].mxu0
    %260 = vmatprep.mubr.f32.mxu0 0.0
    %261 = vmatmul.mubr.f32.gmra.mrb[0].mxu0 %v121
    %v262 = vpop.f32.mrb[0].mxu0
    %v263 = vadd.f32 0.0, %v262
    %v264 = vpop.f32.mrb[0].mxu0
    %265 = vmatprep.mubr.f32.mxu0 0.0
    %266 = vmatmul.mubr.f32.gmra.mrb[0].mxu0 %v124
    %v267 = vpop.f32.mrb[0].mxu0
    %v268 = vadd.f32 0.0, %v267
    %v269 = vpop.f32.mrb[0].mxu0
    %270 = vdwg.mxu0
    %v271 = vld [vmem:[#allocation3] sm:$0xff]
    %v272 = vld [vmem:[#allocation3 + $0x8] sm:$0xff]
    %v273 = vld [vmem:[#allocation3 + $0x10] sm:$0xff]
    %v274 = vld [vmem:[#allocation3 + $0x18] sm:$0xff]
    %v275 = vld [vmem:[#allocation3 + $0x20] sm:$0xff]
    %v276 = vld [vmem:[#allocation3 + $0x28] sm:$0xff]
    %v277 = vld [vmem:[#allocation3 + $0x30] sm:$0xff]
    %v278 = vld [vmem:[#allocation3 + $0x38] sm:$0xff]
    %279 = vmatprep.subr.mxu0 0.0
    %280 = vmatpush1.msra.mxu0 %v271
    %281 = vmatprep.subr.mxu0 0.0
    %282 = vmatpush1.msra.mxu0 %v272
    %283 = vmatprep.subr.mxu0 0.0
    %284 = vmatpush1.msra.mxu0 %v273
    %285 = vmatprep.subr.mxu0 0.0
    %286 = vmatpush1.msra.mxu0 %v274
    %287 = vmatprep.subr.mxu0 0.0
    %288 = vmatpush1.msra.mxu0 %v275
    %289 = vmatprep.subr.mxu0 0.0
    %290 = vmatpush1.msra.mxu0 %v276
    %291 = vmatprep.subr.mxu0 0.0
    %292 = vmatpush1.msra.mxu0 %v277
    %293 = vmatprep.subr.mxu0 0.0
    %294 = vmatpush1.msra.mxu0 %v278
    %295 = vmatprep.subr.mxu0 0.0
    %296 = vmatpush1.msra.mxu0 0.0
    %297 = vmatprep.subr.mxu0 0.0
    %298 = vmatpush1.msra.mxu0 0.0
    %299 = vmatprep.subr.mxu0 0.0
    %300 = vmatpush1.msra.mxu0 0.0
    %301 = vmatprep.subr.mxu0 0.0
    %302 = vmatpush1.msra.mxu0 0.0
    %303 = vmatprep.subr.mxu0 0.0
    %304 = vmatpush1.msra.mxu0 0.0
    %305 = vmatprep.subr.mxu0 0.0
    %306 = vmatpush1.msra.mxu0 0.0
    %307 = vmatprep.subr.mxu0 0.0
    %308 = vmatpush1.msra.mxu0 0.0
    %309 = vmatprep.subr.mxu0 0.0
    %310 = vmatpush1.msra.mxu0 0.0
    %311 = vmatprep.subr.mxu0 0.0
    %312 = vmatpush1.msra.mxu0 0.0
    %313 = vmatprep.subr.mxu0 0.0
    %314 = vmatpush1.msra.mxu0 0.0
    %315 = vmatprep.subr.mxu0 0.0
    %316 = vmatpush1.msra.mxu0 0.0
    %317 = vmatprep.subr.mxu0 0.0
    %318 = vmatpush1.msra.mxu0 0.0
    %319 = vmatprep.subr.mxu0 0.0
    %320 = vmatpush1.msra.mxu0 0.0
    %321 = vmatprep.subr.mxu0 0.0
    %322 = vmatpush1.msra.mxu0 0.0
    %323 = vmatprep.subr.mxu0 0.0
    %324 = vmatpush1.msra.mxu0 0.0
    %325 = vmatprep.subr.mxu0 0.0
    %326 = vmatpush1.msra.mxu0 0.0
    %327 = vmatprep.subr.mxu0 0.0
    %328 = vmatpush1.msra.mxu0 0.0
    %329 = vmatprep.subr.mxu0 0.0
    %330 = vmatpush1.msra.mxu0 0.0
    %331 = vmatprep.subr.mxu0 0.0
    %332 = vmatpush1.msra.mxu0 0.0
    %333 = vmatprep.subr.mxu0 0.0
    %334 = vmatpush1.msra.mxu0 0.0
    %335 = vmatprep.subr.mxu0 0.0
    %336 = vmatpush1.msra.mxu0 0.0
    %337 = vmatprep.subr.mxu0 0.0
    %338 = vmatpush1.msra.mxu0 0.0
    %339 = vmatprep.subr.mxu0 0.0
    %340 = vmatpush1.msra.mxu0 0.0
    %341 = vmatprep.subr.mxu0 0.0
    %342 = vmatpush1.msra.mxu0 0.0
    %343 = vmatprep.mubr.f32.mxu0 0.0
    %344 = vmatmul.mubr.f32.gmra.mrb[0].mxu0 %v79
    %v345 = vpop.f32.mrb[0].mxu0
    %v346 = vadd.f32 0.0, %v345
    %v347 = vpop.f32.mrb[0].mxu0
    %348 = vmatprep.mubr.f32.mxu0 0.0
    %349 = vmatmul.mubr.f32.gmra.mrb[0].mxu0 %v82
    %v350 = vpop.f32.mrb[0].mxu0
    %v351 = vadd.f32 0.0, %v350
    %v352 = vpop.f32.mrb[0].mxu0
    %353 = vmatprep.mubr.f32.mxu0 0.0
    %354 = vmatmul.mubr.f32.gmra.mrb[0].mxu0 %v85
    %v355 = vpop.f32.mrb[0].mxu0
    %v356 = vadd.f32 0.0, %v355
    %v357 = vpop.f32.mrb[0].mxu0
    %358 = vmatprep.mubr.f32.mxu0 0.0
    %359 = vmatmul.mubr.f32.gmra.mrb[0].mxu0 %v88
    %v360 = vpop.f32.mrb[0].mxu0
    %v361 = vadd.f32 0.0, %v360
    %v362 = vpop.f32.mrb[0].mxu0
    %363 = vmatprep.mubr.f32.mxu0 0.0
    %364 = vmatmul.mubr.f32.gmra.mrb[0].mxu0 %v91
    %v365 = vpop.f32.mrb[0].mxu0
    %v366 = vadd.f32 0.0, %v365
    %v367 = vpop.f32.mrb[0].mxu0
    %368 = vmatprep.mubr.f32.mxu0 0.0
    %369 = vmatmul.mubr.f32.gmra.mrb[0].mxu0 %v94
    %v370 = vpop.f32.mrb[0].mxu0
    %v371 = vadd.f32 0.0, %v370
    %v372 = vpop.f32.mrb[0].mxu0
    %373 = vmatprep.mubr.f32.mxu0 0.0
    %374 = vmatmul.mubr.f32.gmra.mrb[0].mxu0 %v97
    %v375 = vpop.f32.mrb[0].mxu0
    %v376 = vadd.f32 0.0, %v375
    %v377 = vpop.f32.mrb[0].mxu0
    %378 = vmatprep.mubr.f32.mxu0 0.0
    %379 = vmatmul.mubr.f32.gmra.mrb[0].mxu0 %v100
    %v380 = vpop.f32.mrb[0].mxu0
    %v381 = vadd.f32 0.0, %v380
    %v382 = vpop.f32.mrb[0].mxu0
    %383 = vmatprep.mubr.f32.mxu0 0.0
    %384 = vmatmul.mubr.f32.gmra.mrb[0].mxu0 %v103
    %v385 = vpop.f32.mrb[0].mxu0
    %v386 = vadd.f32 0.0, %v385
    %v387 = vpop.f32.mrb[0].mxu0
    %388 = vmatprep.mubr.f32.mxu0 0.0
    %389 = vmatmul.mubr.f32.gmra.mrb[0].mxu0 %v106
    %v390 = vpop.f32.mrb[0].mxu0
    %v391 = vadd.f32 0.0, %v390
    %v392 = vpop.f32.mrb[0].mxu0
    %393 = vmatprep.mubr.f32.mxu0 0.0
    %394 = vmatmul.mubr.f32.gmra.mrb[0].mxu0 %v109
    %v395 = vpop.f32.mrb[0].mxu0
    %v396 = vadd.f32 0.0, %v395
    %v397 = vpop.f32.mrb[0].mxu0
    %398 = vmatprep.mubr.f32.mxu0 0.0
    %399 = vmatmul.mubr.f32.gmra.mrb[0].mxu0 %v112
    %v400 = vpop.f32.mrb[0].mxu0
    %v401 = vadd.f32 0.0, %v400
    %v402 = vpop.f32.mrb[0].mxu0
    %403 = vmatprep.mubr.f32.mxu0 0.0
    %404 = vmatmul.mubr.f32.gmra.mrb[0].mxu0 %v115
    %v405 = vpop.f32.mrb[0].mxu0
    %v406 = vadd.f32 0.0, %v405
    %v407 = vpop.f32.mrb[0].mxu0
    %408 = vmatprep.mubr.f32.mxu0 0.0
    %409 = vmatmul.mubr.f32.gmra.mrb[0].mxu0 %v118
    %v410 = vpop.f32.mrb[0].mxu0
    %v411 = vadd.f32 0.0, %v410
    %v412 = vpop.f32.mrb[0].mxu0
    %413 = vmatprep.mubr.f32.mxu0 0.0
    %414 = vmatmul.mubr.f32.gmra.mrb[0].mxu0 %v121
    %v415 = vpop.f32.mrb[0].mxu0
    %v416 = vadd.f32 0.0, %v415
    %v417 = vpop.f32.mrb[0].mxu0
    %418 = vmatprep.mubr.f32.mxu0 0.0
    %419 = vmatmul.mubr.f32.gmra.mrb[0].mxu0 %v124
    %v420 = vpop.f32.mrb[0].mxu0
    %v421 = vadd.f32 0.0, %v420
    %v422 = vpop.f32.mrb[0].mxu0
    %423 = vdwg.mxu0
    %v424 = vand.u32 2147483647, %v193
    %v425 = vand.u32 2147483647, %v198
    %v426 = vand.u32 2147483647, %v203
    %v427 = vand.u32 2147483647, %v208
    %v428 = vand.u32 2147483647, %v213
    %v429 = vand.u32 2147483647, %v218
    %v430 = vand.u32 2147483647, %v223
    %v431 = vand.u32 2147483647, %v228
    %v432 = vand.u32 2147483647, %v233
    %v433 = vand.u32 2147483647, %v238
    %v434 = vand.u32 2147483647, %v243
    %v435 = vand.u32 2147483647, %v248
    %v436 = vand.u32 2147483647, %v253
    %v437 = vand.u32 2147483647, %v258
    %v438 = vand.u32 2147483647, %v263
    %v439 = vand.u32 2147483647, %v268
    %v440 = vsub.f32 0.0, %v424
    %v441 = vsub.f32 0.0, %v425
    %v442 = vsub.f32 0.0, %v426
    %v443 = vsub.f32 0.0, %v427
    %v444 = vsub.f32 0.0, %v428
    %v445 = vsub.f32 0.0, %v429
    %v446 = vsub.f32 0.0, %v430
    %v447 = vsub.f32 0.0, %v431
    %v448 = vsub.f32 0.0, %v432
    %v449 = vsub.f32 0.0, %v433
    %v450 = vsub.f32 0.0, %v434
    %v451 = vsub.f32 0.0, %v435
    %v452 = vsub.f32 0.0, %v436
    %v453 = vsub.f32 0.0, %v437
    %v454 = vsub.f32 0.0, %v438
    %v455 = vsub.f32 0.0, %v439
    %v456 = vmul.f32 %v440, 1.442695
    %v457 = vpow.pop %v456
    %v458 = vmul.f32 %v441, 1.442695
    %v459 = vpow.pop %v458
    %v460 = vmul.f32 %v442, 1.442695
    %v461 = vpow.pop %v460
    %v462 = vmul.f32 %v443, 1.442695
    %v463 = vpow.pop %v462
    %v464 = vmul.f32 %v444, 1.442695
    %v465 = vpow.pop %v464
    %v466 = vmul.f32 %v445, 1.442695
    %v467 = vpow.pop %v466
    %v468 = vmul.f32 %v446, 1.442695
    %v469 = vpow.pop %v468
    %v470 = vmul.f32 %v447, 1.442695
    %v471 = vpow.pop %v470
    %v472 = vmul.f32 %v448, 1.442695
    %v473 = vpow.pop %v472
    %v474 = vmul.f32 %v449, 1.442695
    %v475 = vpow.pop %v474
    %v476 = vmul.f32 %v450, 1.442695
    %v477 = vpow.pop %v476
    %v478 = vmul.f32 %v451, 1.442695
    %v479 = vpow.pop %v478
    %v480 = vmul.f32 %v452, 1.442695
    %v481 = vpow.pop %v480
    %v482 = vmul.f32 %v453, 1.442695
    %v483 = vpow.pop %v482
    %v484 = vmul.f32 %v454, 1.442695
    %v485 = vpow.pop %v484
    %v486 = vmul.f32 %v455, 1.442695
    %v487 = vpow.pop %v486
    %vm488 = vcmp.ge.f32.partialorder %v193, 0.0
    %vm489 = vcmp.ge.f32.partialorder %v198, 0.0
    %vm490 = vcmp.ge.f32.partialorder %v203, 0.0
    %vm491 = vcmp.ge.f32.partialorder %v208, 0.0
    %vm492 = vcmp.ge.f32.partialorder %v213, 0.0
    %vm493 = vcmp.ge.f32.partialorder %v218, 0.0
    %vm494 = vcmp.ge.f32.partialorder %v223, 0.0
    %vm495 = vcmp.ge.f32.partialorder %v228, 0.0
    %vm496 = vcmp.ge.f32.partialorder %v233, 0.0
    %vm497 = vcmp.ge.f32.partialorder %v238, 0.0
    %vm498 = vcmp.ge.f32.partialorder %v243, 0.0
    %vm499 = vcmp.ge.f32.partialorder %v248, 0.0
    %vm500 = vcmp.ge.f32.partialorder %v253, 0.0
    %vm501 = vcmp.ge.f32.partialorder %v258, 0.0
    %vm502 = vcmp.ge.f32.partialorder %v263, 0.0
    %vm503 = vcmp.ge.f32.partialorder %v268, 0.0
    %v504 = vsel %vm488, 1.0, %v457
    %v505 = vsel %vm489, 1.0, %v459
    %v506 = vsel %vm490, 1.0, %v461
    %v507 = vsel %vm491, 1.0, %v463
    %v508 = vsel %vm492, 1.0, %v465
    %v509 = vsel %vm493, 1.0, %v467
    %v510 = vsel %vm494, 1.0, %v469
    %v511 = vsel %vm495, 1.0, %v471
    %v512 = vsel %vm496, 1.0, %v473
    %v513 = vsel %vm497, 1.0, %v475
    %v514 = vsel %vm498, 1.0, %v477
    %v515 = vsel %vm499, 1.0, %v479
    %v516 = vsel %vm500, 1.0, %v481
    %v517 = vsel %vm501, 1.0, %v483
    %v518 = vsel %vm502, 1.0, %v485
    %v519 = vsel %vm503, 1.0, %v487
    %v520 = vadd.f32 %v457, 1.0
    %v521 = vadd.f32 %v459, 1.0
    %v522 = vadd.f32 %v461, 1.0
    %v523 = vadd.f32 %v463, 1.0
    %v524 = vadd.f32 %v465, 1.0
    %v525 = vadd.f32 %v467, 1.0
    %v526 = vadd.f32 %v469, 1.0
    %v527 = vadd.f32 %v471, 1.0
    %v528 = vadd.f32 %v473, 1.0
    %v529 = vadd.f32 %v475, 1.0
    %v530 = vadd.f32 %v477, 1.0
    %v531 = vadd.f32 %v479, 1.0
    %v532 = vadd.f32 %v481, 1.0
    %v533 = vadd.f32 %v483, 1.0
    %v534 = vadd.f32 %v485, 1.0
    %v535 = vadd.f32 %v487, 1.0
    %v536 = vrcp.pop %v520
    %v537 = vmul.f32 %v504, %v536
    %v538 = vrcp.pop %v521
    %v539 = vmul.f32 %v505, %v538
    %v540 = vrcp.pop %v522
    %v541 = vmul.f32 %v506, %v540
    %v542 = vrcp.pop %v523
    %v543 = vmul.f32 %v507, %v542
    %v544 = vrcp.pop %v524
    %v545 = vmul.f32 %v508, %v544
    %v546 = vrcp.pop %v525
    %v547 = vmul.f32 %v509, %v546
    %v548 = vrcp.pop %v526
    %v549 = vmul.f32 %v510, %v548
    %v550 = vrcp.pop %v527
    %v551 = vmul.f32 %v511, %v550
    %v552 = vrcp.pop %v528
    %v553 = vmul.f32 %v512, %v552
    %v554 = vrcp.pop %v529
    %v555 = vmul.f32 %v513, %v554
    %v556 = vrcp.pop %v530
    %v557 = vmul.f32 %v514, %v556
    %v558 = vrcp.pop %v531
    %v559 = vmul.f32 %v515, %v558
    %v560 = vrcp.pop %v532
    %v561 = vmul.f32 %v516, %v560
    %v562 = vrcp.pop %v533
    %v563 = vmul.f32 %v517, %v562
    %v564 = vrcp.pop %v534
    %v565 = vmul.f32 %v518, %v564
    %v566 = vrcp.pop %v535
    %v567 = vmul.f32 %v519, %v566
    %v568 = vmul.f32 %v193, %v537
    %v569 = vmul.f32 %v198, %v539
    %v570 = vmul.f32 %v203, %v541
    %v571 = vmul.f32 %v208, %v543
    %v572 = vmul.f32 %v213, %v545
    %v573 = vmul.f32 %v218, %v547
    %v574 = vmul.f32 %v223, %v549
    %v575 = vmul.f32 %v228, %v551
    %v576 = vmul.f32 %v233, %v553
    %v577 = vmul.f32 %v238, %v555
    %v578 = vmul.f32 %v243, %v557
    %v579 = vmul.f32 %v248, %v559
    %v580 = vmul.f32 %v253, %v561
    %v581 = vmul.f32 %v258, %v563
    %v582 = vmul.f32 %v263, %v565
    %v583 = vmul.f32 %v268, %v567
    %v584 = vmul.f32 %v568, %v346
    %v585 = vmul.f32 %v569, %v351
    %v586 = vmul.f32 %v570, %v356
    %v587 = vmul.f32 %v571, %v361
    %v588 = vmul.f32 %v572, %v366
    %v589 = vmul.f32 %v573, %v371
    %v590 = vmul.f32 %v574, %v376
    %v591 = vmul.f32 %v575, %v381
    %v592 = vmul.f32 %v576, %v386
    %v593 = vmul.f32 %v577, %v391
    %v594 = vmul.f32 %v578, %v396
    %v595 = vmul.f32 %v579, %v401
    %v596 = vmul.f32 %v580, %v406
    %v597 = vmul.f32 %v581, %v411
    %v598 = vmul.f32 %v582, %v416
    %v599 = vmul.f32 %v583, %v421
    %v600 = vld [vmem:[#allocation2] sm:$0xff]
    %v601 = vld [vmem:[#allocation2 + $0x8] sm:$0xff]
    %v602 = vld [vmem:[#allocation2 + $0x10] sm:$0xff]
    %v603 = vld [vmem:[#allocation2 + $0x18] sm:$0xff]
    %v604 = vld [vmem:[#allocation2 + $0x20] sm:$0xff]
    %v605 = vld [vmem:[#allocation2 + $0x28] sm:$0xff]
    %v606 = vld [vmem:[#allocation2 + $0x30] sm:$0xff]
    %v607 = vld [vmem:[#allocation2 + $0x38] sm:$0xff]
    %v608 = vld [vmem:[#allocation2 + $0x40] sm:$0xff]
    %v609 = vld [vmem:[#allocation2 + $0x48] sm:$0xff]
    %v610 = vld [vmem:[#allocation2 + $0x50] sm:$0xff]
    %v611 = vld [vmem:[#allocation2 + $0x58] sm:$0xff]
    %v612 = vld [vmem:[#allocation2 + $0x60] sm:$0xff]
    %v613 = vld [vmem:[#allocation2 + $0x68] sm:$0xff]
    %v614 = vld [vmem:[#allocation2 + $0x70] sm:$0xff]
    %v615 = vld [vmem:[#allocation2 + $0x78] sm:$0xff]
    %v616 = vld [vmem:[%s3] sm:$0xff]
    %v617 = vld [vmem:[%s3 + $0x8] sm:$0xff]
    %v618 = vld [vmem:[%s3 + $0x10] sm:$0xff]
    %v619 = vld [vmem:[%s3 + $0x18] sm:$0xff]
    %v620 = vld [vmem:[%s3 + $0x20] sm:$0xff]
    %v621 = vld [vmem:[%s3 + $0x28] sm:$0xff]
    %v622 = vld [vmem:[%s3 + $0x30] sm:$0xff]
    %v623 = vld [vmem:[%s3 + $0x38] sm:$0xff]
    %v624 = vld [vmem:[%s3 + $0x40] sm:$0xff]
    %v625 = vld [vmem:[%s3 + $0x48] sm:$0xff]
    %v626 = vld [vmem:[%s3 + $0x50] sm:$0xff]
    %v627 = vld [vmem:[%s3 + $0x58] sm:$0xff]
    %v628 = vld [vmem:[%s3 + $0x60] sm:$0xff]
    %v629 = vld [vmem:[%s3 + $0x68] sm:$0xff]
    %v630 = vld [vmem:[%s3 + $0x70] sm:$0xff]
    %v631 = vld [vmem:[%s3 + $0x78] sm:$0xff]
    %632 = vmatprep.subr.mxu0 0.0
    %633 = vmatpush1.msra.mxu0 %v616
    %634 = vmatprep.subr.mxu0 0.0
    %635 = vmatpush1.msra.mxu0 %v617
    %636 = vmatprep.subr.mxu0 0.0
    %637 = vmatpush1.msra.mxu0 %v618
    %638 = vmatprep.subr.mxu0 0.0
    %639 = vmatpush1.msra.mxu0 %v619
    %640 = vmatprep.subr.mxu0 0.0
    %641 = vmatpush1.msra.mxu0 %v620
    %642 = vmatprep.subr.mxu0 0.0
    %643 = vmatpush1.msra.mxu0 %v621
    %644 = vmatprep.subr.mxu0 0.0
    %645 = vmatpush1.msra.mxu0 %v622
    %646 = vmatprep.subr.mxu0 0.0
    %647 = vmatpush1.msra.mxu0 %v623
    %648 = vmatprep.subr.mxu0 0.0
    %649 = vmatpush1.msra.mxu0 %v624
    %650 = vmatprep.subr.mxu0 0.0
    %651 = vmatpush1.msra.mxu0 %v625
    %652 = vmatprep.subr.mxu0 0.0
    %653 = vmatpush1.msra.mxu0 %v626
    %654 = vmatprep.subr.mxu0 0.0
    %655 = vmatpush1.msra.mxu0 %v627
    %656 = vmatprep.subr.mxu0 0.0
    %657 = vmatpush1.msra.mxu0 %v628
    %658 = vmatprep.subr.mxu0 0.0
    %659 = vmatpush1.msra.mxu0 %v629
    %660 = vmatprep.subr.mxu0 0.0
    %661 = vmatpush1.msra.mxu0 %v630
    %662 = vmatprep.subr.mxu0 0.0
    %663 = vmatpush1.msra.mxu0 %v631
    %664 = vmatprep.subr.mxu0 0.0
    %665 = vmatpush1.msra.mxu0 0.0
    %666 = vmatprep.subr.mxu0 0.0
    %667 = vmatpush1.msra.mxu0 0.0
    %668 = vmatprep.subr.mxu0 0.0
    %669 = vmatpush1.msra.mxu0 0.0
    %670 = vmatprep.subr.mxu0 0.0
    %671 = vmatpush1.msra.mxu0 0.0
    %672 = vmatprep.subr.mxu0 0.0
    %673 = vmatpush1.msra.mxu0 0.0
    %674 = vmatprep.subr.mxu0 0.0
    %675 = vmatpush1.msra.mxu0 0.0
    %676 = vmatprep.subr.mxu0 0.0
    %677 = vmatpush1.msra.mxu0 0.0
    %678 = vmatprep.subr.mxu0 0.0
    %679 = vmatpush1.msra.mxu0 0.0
    %680 = vmatprep.subr.mxu0 0.0
    %681 = vmatpush1.msra.mxu0 0.0
    %682 = vmatprep.subr.mxu0 0.0
    %683 = vmatpush1.msra.mxu0 0.0
    %684 = vmatprep.subr.mxu0 0.0
    %685 = vmatpush1.msra.mxu0 0.0
    %686 = vmatprep.subr.mxu0 0.0
    %687 = vmatpush1.msra.mxu0 0.0
    %688 = vmatprep.subr.mxu0 0.0
    %689 = vmatpush1.msra.mxu0 0.0
    %690 = vmatprep.subr.mxu0 0.0
    %691 = vmatpush1.msra.mxu0 0.0
    %692 = vmatprep.subr.mxu0 0.0
    %693 = vmatpush1.msra.mxu0 0.0
    %694 = vmatprep.subr.mxu0 0.0
    %695 = vmatpush1.msra.mxu0 0.0
    %696 = vmatprep.mubr.f32.mxu0 0.0
    %697 = vmatmul.mubr.f32.gmra.mrb[0].mxu0 %v584
    %v698 = vpop.f32.mrb[0].mxu0
    %v699 = vadd.f32 0.0, %v698
    %v700 = vpop.f32.mrb[0].mxu0
    %701 = vmatprep.mubr.f32.mxu0 0.0
    %702 = vmatmul.mubr.f32.gmra.mrb[0].mxu0 %v585
    %v703 = vpop.f32.mrb[0].mxu0
    %v704 = vadd.f32 0.0, %v703
    %v705 = vpop.f32.mrb[0].mxu0
    %706 = vmatprep.mubr.f32.mxu0 0.0
    %707 = vmatmul.mubr.f32.gmra.mrb[0].mxu0 %v586
    %v708 = vpop.f32.mrb[0].mxu0
    %v709 = vadd.f32 0.0, %v708
    %v710 = vpop.f32.mrb[0].mxu0
    %711 = vmatprep.mubr.f32.mxu0 0.0
    %712 = vmatmul.mubr.f32.gmra.mrb[0].mxu0 %v587
    %v713 = vpop.f32.mrb[0].mxu0
    %v714 = vadd.f32 0.0, %v713
    %v715 = vpop.f32.mrb[0].mxu0
    %716 = vmatprep.mubr.f32.mxu0 0.0
    %717 = vmatmul.mubr.f32.gmra.mrb[0].mxu0 %v588
    %v718 = vpop.f32.mrb[0].mxu0
    %v719 = vadd.f32 0.0, %v718
    %v720 = vpop.f32.mrb[0].mxu0
    %721 = vmatprep.mubr.f32.mxu0 0.0
    %722 = vmatmul.mubr.f32.gmra.mrb[0].mxu0 %v589
    %v723 = vpop.f32.mrb[0].mxu0
    %v724 = vadd.f32 0.0, %v723
    %v725 = vpop.f32.mrb[0].mxu0
    %726 = vmatprep.mubr.f32.mxu0 0.0
    %727 = vmatmul.mubr.f32.gmra.mrb[0].mxu0 %v590
    %v728 = vpop.f32.mrb[0].mxu0
    %v729 = vadd.f32 0.0, %v728
    %v730 = vpop.f32.mrb[0].mxu0
    %731 = vmatprep.mubr.f32.mxu0 0.0
    %732 = vmatmul.mubr.f32.gmra.mrb[0].mxu0 %v591
    %v733 = vpop.f32.mrb[0].mxu0
    %v734 = vadd.f32 0.0, %v733
    %v735 = vpop.f32.mrb[0].mxu0
    %736 = vmatprep.mubr.f32.mxu0 0.0
    %737 = vmatmul.mubr.f32.gmra.mrb[0].mxu0 %v592
    %v738 = vpop.f32.mrb[0].mxu0
    %v739 = vadd.f32 0.0, %v738
    %v740 = vpop.f32.mrb[0].mxu0
    %741 = vmatprep.mubr.f32.mxu0 0.0
    %742 = vmatmul.mubr.f32.gmra.mrb[0].mxu0 %v593
    %v743 = vpop.f32.mrb[0].mxu0
    %v744 = vadd.f32 0.0, %v743
    %v745 = vpop.f32.mrb[0].mxu0
    %746 = vmatprep.mubr.f32.mxu0 0.0
    %747 = vmatmul.mubr.f32.gmra.mrb[0].mxu0 %v594
    %v748 = vpop.f32.mrb[0].mxu0
    %v749 = vadd.f32 0.0, %v748
    %v750 = vpop.f32.mrb[0].mxu0
    %751 = vmatprep.mubr.f32.mxu0 0.0
    %752 = vmatmul.mubr.f32.gmra.mrb[0].mxu0 %v595
    %v753 = vpop.f32.mrb[0].mxu0
    %v754 = vadd.f32 0.0, %v753
    %v755 = vpop.f32.mrb[0].mxu0
    %756 = vmatprep.mubr.f32.mxu0 0.0
    %757 = vmatmul.mubr.f32.gmra.mrb[0].mxu0 %v596
    %v758 = vpop.f32.mrb[0].mxu0
    %v759 = vadd.f32 0.0, %v758
    %v760 = vpop.f32.mrb[0].mxu0
    %761 = vmatprep.mubr.f32.mxu0 0.0
    %762 = vmatmul.mubr.f32.gmra.mrb[0].mxu0 %v597
    %v763 = vpop.f32.mrb[0].mxu0
    %v764 = vadd.f32 0.0, %v763
    %v765 = vpop.f32.mrb[0].mxu0
    %766 = vmatprep.mubr.f32.mxu0 0.0
    %767 = vmatmul.mubr.f32.gmra.mrb[0].mxu0 %v598
    %v768 = vpop.f32.mrb[0].mxu0
    %v769 = vadd.f32 0.0, %v768
    %v770 = vpop.f32.mrb[0].mxu0
    %771 = vmatprep.mubr.f32.mxu0 0.0
    %772 = vmatmul.mubr.f32.gmra.mrb[0].mxu0 %v599
    %v773 = vpop.f32.mrb[0].mxu0
    %v774 = vadd.f32 0.0, %v773
    %v775 = vpop.f32.mrb[0].mxu0
    %776 = vdwg.mxu0
    %v777 = vadd.f32 %v600, %v699
    %v778 = vadd.f32 %v601, %v704
    %v779 = vadd.f32 %v602, %v709
    %v780 = vadd.f32 %v603, %v714
    %v781 = vadd.f32 %v604, %v719
    %v782 = vadd.f32 %v605, %v724
    %v783 = vadd.f32 %v606, %v729
    %v784 = vadd.f32 %v607, %v734
    %v785 = vadd.f32 %v608, %v739
    %v786 = vadd.f32 %v609, %v744
    %v787 = vadd.f32 %v610, %v749
    %v788 = vadd.f32 %v611, %v754
    %v789 = vadd.f32 %v612, %v759
    %v790 = vadd.f32 %v613, %v764
    %v791 = vadd.f32 %v614, %v769
    %v792 = vadd.f32 %v615, %v774
    %793 = vst.msk [vmem:[#allocation2] sm:$0xff] %vm77, %v777
    %794 = vst.msk [vmem:[#allocation2 + $0x8] sm:$0xff] %vm77, %v778
    %795 = vst.msk [vmem:[#allocation2 + $0x10] sm:$0xff] %vm77, %v779
    %796 = vst.msk [vmem:[#allocation2 + $0x18] sm:$0xff] %vm77, %v780
    %797 = vst.msk [vmem:[#allocation2 + $0x20] sm:$0xff] %vm77, %v781
    %798 = vst.msk [vmem:[#allocation2 + $0x28] sm:$0xff] %vm77, %v782
    %799 = vst.msk [vmem:[#allocation2 + $0x30] sm:$0xff] %vm77, %v783
    %800 = vst.msk [vmem:[#allocation2 + $0x38] sm:$0xff] %vm77, %v784
    %801 = vst.msk [vmem:[#allocation2 + $0x40] sm:$0xff] %vm77, %v785
    %802 = vst.msk [vmem:[#allocation2 + $0x48] sm:$0xff] %vm77, %v786
    %803 = vst.msk [vmem:[#allocation2 + $0x50] sm:$0xff] %vm77, %v787
    %804 = vst.msk [vmem:[#allocation2 + $0x58] sm:$0xff] %vm77, %v788
    %805 = vst.msk [vmem:[#allocation2 + $0x60] sm:$0xff] %vm77, %v789
    %806 = vst.msk [vmem:[#allocation2 + $0x68] sm:$0xff] %vm77, %v790
    %807 = vst.msk [vmem:[#allocation2 + $0x70] sm:$0xff] %vm77, %v791
    %808 = vst.msk [vmem:[#allocation2 + $0x78] sm:$0xff] %vm77, %v792
    // Predicated region
    $region26: #{_swiglu_mlp.1} parent=1 // pred_check
      %p809 = pneg %p32
    $region27: #{_swiglu_mlp.1} parent=1 // pred_check_branch
      %811 = sbr.rel (%p809) target = $region29
    $region28: #{_swiglu_mlp.1} parent=1 // pred_region
      %v812 = vld [vmem:[#allocation2] sm:$0xff]
      %v813 = vld [vmem:[#allocation2 + $0x8] sm:$0xff]
      %v814 = vld [vmem:[#allocation2 + $0x10] sm:$0xff]
      %v815 = vld [vmem:[#allocation2 + $0x18] sm:$0xff]
      %v816 = vld [vmem:[#allocation2 + $0x20] sm:$0xff]
      %v817 = vld [vmem:[#allocation2 + $0x28] sm:$0xff]
      %v818 = vld [vmem:[#allocation2 + $0x30] sm:$0xff]
      %v819 = vld [vmem:[#allocation2 + $0x38] sm:$0xff]
      %v820 = vld [vmem:[#allocation2 + $0x40] sm:$0xff]
      %v821 = vld [vmem:[#allocation2 + $0x48] sm:$0xff]
      %v822 = vld [vmem:[#allocation2 + $0x50] sm:$0xff]
      %v823 = vld [vmem:[#allocation2 + $0x58] sm:$0xff]
      %v824 = vld [vmem:[#allocation2 + $0x60] sm:$0xff]
      %v825 = vld [vmem:[#allocation2 + $0x68] sm:$0xff]
      %v826 = vld [vmem:[#allocation2 + $0x70] sm:$0xff]
      %v827 = vld [vmem:[#allocation2 + $0x78] sm:$0xff]
      %828 = vst.msk [vmem:[#allocation6] sm:$0xff] %vm77, %v812
      %829 = vst.msk [vmem:[#allocation6 + $0x8] sm:$0xff] %vm77, %v813
      %830 = vst.msk [vmem:[#allocation6 + $0x10] sm:$0xff] %vm77, %v814
      %831 = vst.msk [vmem:[#allocation6 + $0x18] sm:$0xff] %vm77, %v815
      %832 = vst.msk [vmem:[#allocation6 + $0x20] sm:$0xff] %vm77, %v816
      %833 = vst.msk [vmem:[#allocation6 + $0x28] sm:$0xff] %vm77, %v817
      %834 = vst.msk [vmem:[#allocation6 + $0x30] sm:$0xff] %vm77, %v818
      %835 = vst.msk [vmem:[#allocation6 + $0x38] sm:$0xff] %vm77, %v819
      %836 = vst.msk [vmem:[#allocation6 + $0x40] sm:$0xff] %vm77, %v820
      %837 = vst.msk [vmem:[#allocation6 + $0x48] sm:$0xff] %vm77, %v821
      %838 = vst.msk [vmem:[#allocation6 + $0x50] sm:$0xff] %vm77, %v822
      %839 = vst.msk [vmem:[#allocation6 + $0x58] sm:$0xff] %vm77, %v823
      %840 = vst.msk [vmem:[#allocation6 + $0x60] sm:$0xff] %vm77, %v824
      %841 = vst.msk [vmem:[#allocation6 + $0x68] sm:$0xff] %vm77, %v825
      %842 = vst.msk [vmem:[#allocation6 + $0x70] sm:$0xff] %vm77, %v826
      %843 = vst.msk [vmem:[#allocation6 + $0x78] sm:$0xff] %vm77, %v827
    $region29: #{_swiglu_mlp.1} parent=1 // pred_fallthru
      _
    // Predicated region
    $region30: #{_swiglu_mlp.1} parent=1 // pred_check
      _
    $region31: #{_swiglu_mlp.1} parent=1 // pred_check_branch
      %845 = sbr.rel (0) target = $region33
    $region32: #{_swiglu_mlp.1} parent=1 // pred_region
      %s847 = ssub.s32 2048, 2048
      %848 = vsyncadd [#allocation5], %s847
      %s849 = sshll.u32 [#allocation6], 4
      %s850 = int_to_ptr.vmem [resolvable:$true] %s849
      %855 = dma.vmem_to_hbm [thread:$0]  %s850, 2048, %s4, [#allocation5], 128, 128, 8
    $region33: #{_swiglu_mlp.1} parent=1 // pred_fallthru
      _
    // Predicated region
    $region34: #{_swiglu_mlp.1} parent=1 // pred_check
      _
    $region35: #{_swiglu_mlp.1} parent=1 // pred_check_branch
      %857 = sbr.rel (0) target = $region37
    $region36: #{_swiglu_mlp.1} parent=1 // pred_region
      %858 = dma.done [#allocation5], 2048
    $region37: #{_swiglu_mlp.1} parent=1 // pred_fallthru
      _
    %859 = vsyncpa [#allocation4], 1
    %860 = vsyncpa [#allocation5], 1

</llo_original>
